<compile_context>
chip_gen: v7x
topology: tpu7x:2x2x1
jax: 0.10.0
libtpu: 0.0.40
codegen_flags: <defaults>
</compile_context>

<pallas_src>
import functools

import jax
import jax.numpy as jnp
from jax.experimental import pallas as pl
from jax.experimental.pallas import tpu as pltpu

EPS = 1e-5
LANE = 128
MAX_CONV_ROWS = 512       # per-matmul M rows kept modest so the f32 accumulator stays cheap
MAX_EW_ROWS = 2048        # elementwise pass: big lane-dense blocks amortize per-step overhead


def _round_up(x, m):
    return (x + m - 1) // m * m


def _vmem_limit_bytes():
    """Per-generation VMEM sizing: 3/4 of capacity, conservative 64 MiB fallback (v7x-safe)."""
    cap = 64 * 1024 * 1024
    try:
        get_info = getattr(pltpu, "get_tpu_info", None)
        if get_info is not None:
            info = get_info()
            for name in ("vmem_capacity_bytes", "vmem_size_bytes", "vmem_bytes"):
                v = getattr(info, name, None)
                if v:
                    cap = int(v)
                    break
    except Exception:
        pass
    return min(3 * cap // 4, 96 * 1024 * 1024)


def _pick_rows(total, max_rows):
    """Largest row block that evenly tiles `total` with mult-of-8 (or full) blocks."""
    if total <= max_rows:
        return total
    cands = [d for d in range(8, max_rows + 1) if total % d == 0 and d % 8 == 0]
    return max(cands) if cands else total


def _pick_tr(ho, wo, max_tm):
    """Largest output-row tile (a divisor of ho) with tr*wo <= max_tm and mult-of-8 blocks."""
    if ho * wo <= max_tm:
        return ho
    cands = [d for d in range(1, ho)
             if ho % d == 0 and d * wo <= max_tm and (d * wo) % 8 == 0]
    return max(cands) if cands else ho


def _taps_per_group(ci):
    """Fold taps along K so each MXU matmul sees K ~= 256 (full K-fill on v6e/v7x)."""
    return max(1, 256 // ci) if ci % LANE == 0 else 1


def _group_weights(w9p, ci, cp, tpg):
    """(9, ci, cp) f32 -> (ceil(9/tpg), tpg*ci, cp) bf16, zero-padding the unused tap slot."""
    ng = -(-9 // tpg)
    pad_t = ng * tpg - 9
    if pad_t:
        w9p = jnp.concatenate([w9p, jnp.zeros((pad_t,) + w9p.shape[1:], w9p.dtype)], axis=0)
    return w9p.reshape(ng, tpg * ci, cp).astype(jnp.bfloat16)


def _make_tap_tiles(xpad, stride, ho, wo, halo, tr):
    """Stride-phase split + per-row-tile halo duplication of a spatially zero-padded NHWC tensor.
    Output (N, T, nph*(tr+halo), wo+halo, C): a plain Blocked BlockSpec can then express every
    3x3 window, so Pallas auto double-buffers the HBM->VMEM DMA (no manual pl.ANY copies)."""
    s = stride
    rows = tr + halo
    n_tiles = ho // tr
    n = xpad.shape[0]
    c = xpad.shape[-1]
    phases = []
    for pr in range(s):
        for pc in range(s):
            ph = xpad[:, pr::s, pc::s, :][:, :ho + halo, :wo + halo, :]
            pad_r = ho + halo - ph.shape[1]
            pad_c = wo + halo - ph.shape[2]
            if pad_r or pad_c:
                ph = jnp.pad(ph, ((0, 0), (0, pad_r), (0, pad_c), (0, 0)))
            phases.append(ph)
    ph = jnp.stack(phases, axis=1)                                # (N, nph, ho+halo, wo+halo, C)
    tiles = jnp.stack([ph[:, :, i * tr:i * tr + rows] for i in range(n_tiles)], axis=1)
    return tiles.reshape(n, n_tiles, s * s * rows, wo + halo, c)  # (N, T, nph*rows, wo+halo, C)


# ---------------------------------------------------------------------------
# In-kernel helpers / kernels
# ---------------------------------------------------------------------------
def _tile_stats(y, count):
    """Per-tile BN partials: (sum, M2 about the tile mean) -> (2, C). Combined with Chan."""
    s = jnp.sum(y, axis=0, keepdims=True)
    mu = s * (1.0 / count)
    d = y - mu
    m2 = jnp.sum(d * d, axis=0, keepdims=True)
    return jnp.concatenate([s, m2], axis=0)


def _conv1_gemm_kernel(*refs, with_skip):
    """conv1 for small cin: single GEMM over K = 9*cin (+ fused 1x1 skip conv) + BN partials."""
    if with_skip:
        xg_ref, w_ref, b_ref, xc_ref, ws_ref, bs_ref, y_ref, st_ref, sp_ref, sst_ref = refs
    else:
        xg_ref, w_ref, b_ref, y_ref, st_ref = refs
    xg = xg_ref[0]                                             # (tm, 9*cin) bf16
    tm = xg.shape[0]
    y = jnp.dot(xg, w_ref[...], preferred_element_type=jnp.float32) + b_ref[...]
    y_ref[0] = y
    st_ref[0, 0] = _tile_stats(y, tm)
    if with_skip:
        sp = jnp.dot(xc_ref[0], ws_ref[...], preferred_element_type=jnp.float32) + bs_ref[...]
        sp_ref[0] = sp
        sst_ref[0, 0] = _tile_stats(sp, tm)


def _conv_tap_kernel(*refs, stride, tr, wo, ho, halo, ci, co, tpg, fuse_bn, with_skip):
    """3x3 conv over halo-tiled input.  fuse_bn: apply BN1 scale/shift + ReLU + interior mask to
    the (f32) input tile, cast once to bf16 scratch, and feed the taps from it (conv2 path)."""
    it = iter(refs)
    x_ref = next(it)
    if fuse_bn:
        sc_ref = next(it)
        sh_ref = next(it)
    w_ref = next(it)
    b_ref = next(it)
    if with_skip:
        ws_ref = next(it)
        bs_ref = next(it)
    y_ref = next(it)
    st_ref = next(it)
    if with_skip:
        sp_ref = next(it)
        sst_ref = next(it)
    a_buf = next(it) if fuse_bn else None

    rows = tr + halo
    tm = tr * wo
    i = pl.program_id(1)

    if fuse_bn:
        xb = x_ref[0, 0]                                        # (rows, wo+halo, ci) f32
        act = jnp.maximum(xb * sc_ref[...] + sh_ref[...], 0.0)
        rg = jax.lax.broadcasted_iota(jnp.int32, (rows, wo + halo), 0) + i * tr
        cg = jax.lax.broadcasted_iota(jnp.int32, (rows, wo + halo), 1)
        keep = ((rg >= 1) & (rg <= ho) & (cg >= 1) & (cg <= wo))[:, :, None]
        a_buf[...] = jnp.where(keep, act, 0.0).astype(jnp.bfloat16)

    def tap(t):
        kh, kw = t // 3, t % 3
        if fuse_bn:
            return a_buf[kh:kh + tr, kw:kw + wo, :].reshape(tm, ci)
        p = (kh % stride) * stride + (kw % stride)
        r0 = p * rows + kh // stride
        c0 = kw // stride
        return x_ref[0, 0, r0:r0 + tr, c0:c0 + wo, :].reshape(tm, ci)

    n_groups = -(-9 // tpg)
    acc = jnp.zeros((tm, co), jnp.float32)
    for g in range(n_groups):
        ts = [min(g * tpg + j, 8) for j in range(tpg)]          # padded tap duplicates tap 8;
        if tpg == 1:                                            # its weight rows are zero.
            a2 = tap(ts[0])
        else:
            a2 = jnp.concatenate([tap(t) for t in ts], axis=-1)
        acc = acc + jnp.dot(a2, w_ref[g], preferred_element_type=jnp.float32)
    y = acc + b_ref[...]
    y_ref[0] = y
    st_ref[0, 0] = _tile_stats(y, tm)

    if with_skip:
        # 1x1/stride-s skip conv reads exactly the centre tap already resident in VMEM.
        sp = jnp.dot(tap(4), ws_ref[...], preferred_element_type=jnp.float32) + bs_ref[...]
        sp_ref[0] = sp
        sst_ref[0, 0] = _tile_stats(sp, tm)


def _finalize_kernel(*refs, skip_has_bn):
    """BN2-apply + (BN'd skip | identity) add + ReLU (pure stream kernel, big lane-dense tiles)."""
    if skip_has_bn:
        y_ref, id_ref, sc2_ref, sh2_ref, scs_ref, shs_ref, o_ref = refs
        ident = id_ref[...] * scs_ref[...] + shs_ref[...]
    else:
        y_ref, id_ref, sc2_ref, sh2_ref, o_ref = refs
        ident = id_ref[...]
    o_ref[...] = jnp.maximum(y_ref[...] * sc2_ref[...] + sh2_ref[...] + ident, 0.0)


def _bn_scale_shift(stats, tile_count, total_count, gamma_p, beta_p):
    """Combine per-tile (sum, M2) partials with Chan's parallel-variance formula (training BN)."""
    sums = stats[:, :, 0, :]
    m2s = stats[:, :, 1, :]
    tile_mean = sums / tile_count
    gmean = jnp.sum(sums, axis=(0, 1)) / total_count
    var = (jnp.sum(m2s, axis=(0, 1)) +
           tile_count * jnp.sum((tile_mean - gmean) ** 2, axis=(0, 1))) / total_count
    var = jnp.maximum(var, 0.0)
    scale = gamma_p * jax.lax.rsqrt(var + EPS)
    shift = beta_p - gmean * scale
    return scale.reshape(1, -1), shift.reshape(1, -1)


# ---------------------------------------------------------------------------
# Module
# ---------------------------------------------------------------------------
class ResidualBlockPallas:
    """Pallas TPU port of the PyTorch ResidualBlock (BatchNorm in training mode, i.e. batch
    statistics, matching the nn.Module default .train() forward)."""

    def __init__(self, in_channels, out_channels, stride=1, key=None):
        self.cin = in_channels
        self.cout = out_channels
        self.stride = stride
        self.has_skip_conv = (stride != 1) or (in_channels != out_channels)
        self.cp = _round_up(out_channels, LANE)          # lane-dense channel dim
        self.small_cin = in_channels <= 32
        self.vmem_limit = _vmem_limit_bytes()

        key = jax.random.PRNGKey(42) if key is None else key
        ks = jax.random.split(key, 12)
        f32 = jnp.float32
        self.w1 = 0.1 * jax.random.normal(ks[0], (3, 3, in_channels, out_channels), f32)
        self.b1 = 0.1 * jax.random.normal(ks[1], (out_channels,), f32)
        self.g1 = 1.0 + 0.1 * jax.random.normal(ks[2], (out_channels,), f32)
        self.be1 = 0.1 * jax.random.normal(ks[3], (out_channels,), f32)
        self.w2 = 0.1 * jax.random.normal(ks[4], (3, 3, out_channels, out_channels), f32)
        self.b2 = 0.1 * jax.random.normal(ks[5], (out_channels,), f32)
        self.g2 = 1.0 + 0.1 * jax.random.normal(ks[6], (out_channels,), f32)
        self.be2 = 0.1 * jax.random.normal(ks[7], (out_channels,), f32)
        if self.has_skip_conv:
            self.ws = 0.1 * jax.random.normal(ks[8], (in_channels, out_channels), f32)
            self.bs = 0.1 * jax.random.normal(ks[9], (out_channels,), f32)
            self.gs = 1.0 + 0.1 * jax.random.normal(ks[10], (out_channels,), f32)
            self.bes = 0.1 * jax.random.normal(ks[11], (out_channels,), f32)

        cp, pc = self.cp, self.cp - out_channels

        def pad_c(v, const=0.0):
            return jnp.pad(v, [(0, 0)] * (v.ndim - 1) + [(0, pc)], constant_values=const)

        # conv1 weights
        w1_9 = pad_c(self.w1.reshape(9, in_channels, out_channels))      # (9, cin, cp) f32
        if self.small_cin:
            # single-GEMM layout: K = 9*cin (taps are concatenated along K in the wrapper)
            self.w1g = w1_9.reshape(9 * in_channels, cp).astype(jnp.bfloat16)
            self.tpg1 = None
        else:
            self.tpg1 = _taps_per_group(in_channels)
            self.w1g = _group_weights(w1_9, in_channels, cp, self.tpg1)
        self.b1p = pad_c(self.b1).reshape(1, cp)
        self.g1p = pad_c(self.g1, 1.0)
        self.be1p = pad_c(self.be1)

        # conv2 weights: K folded into groups of tpg2 taps (K = tpg2*cp per MXU matmul)
        w2_9 = jnp.pad(self.w2.reshape(9, out_channels, out_channels),
                       ((0, 0), (0, pc), (0, pc)))
        self.tpg2 = _taps_per_group(cp)
        self.w2g = _group_weights(w2_9, cp, cp, self.tpg2)
        self.b2p = pad_c(self.b2).reshape(1, cp)
        self.g2p = pad_c(self.g2, 1.0)
        self.be2p = pad_c(self.be2)

        if self.has_skip_conv:
            self.wsp = pad_c(self.ws).astype(jnp.bfloat16)                # (cin, cp)
            self.bsp = pad_c(self.bs).reshape(1, cp)
            self.gsp = pad_c(self.gs, 1.0)
            self.besp = pad_c(self.bes)

    # ------------------------------ pallas_call wrappers ------------------------------

    def _conv1_gemm_call(self, xg, xc):
        batch, howo, k1 = xg.shape
        cp = self.cp
        with_skip = xc is not None
        tm = _pick_rows(howo, MAX_CONV_ROWS)
        n_tiles = howo // tm

        def bcast(shape):
            return pl.BlockSpec(shape, lambda n, t: (0,) * len(shape))

        in_specs = [pl.BlockSpec((1, tm, k1), lambda n, t: (n, t, 0)),
                    bcast(self.w1g.shape), bcast(self.b1p.shape)]
        args = [xg, self.w1g, self.b1p]
        out_shape = [jax.ShapeDtypeStruct((batch, howo, cp), jnp.float32),
                     jax.ShapeDtypeStruct((batch, n_tiles, 2, cp), jnp.float32)]
        out_specs = [pl.BlockSpec((1, tm, cp), lambda n, t: (n, t, 0)),
                     pl.BlockSpec((1, 1, 2, cp), lambda n, t: (n, t, 0, 0))]
        if with_skip:
            ci = xc.shape[-1]
            in_specs += [pl.BlockSpec((1, tm, ci), lambda n, t: (n, t, 0)),
                         bcast(self.wsp.shape), bcast(self.bsp.shape)]
            args += [xc, self.wsp, self.bsp]
            out_shape += [jax.ShapeDtypeStruct((batch, howo, cp), jnp.float32),
                          jax.ShapeDtypeStruct((batch, n_tiles, 2, cp), jnp.float32)]
            out_specs += [pl.BlockSpec((1, tm, cp), lambda n, t: (n, t, 0)),
                          pl.BlockSpec((1, 1, 2, cp), lambda n, t: (n, t, 0, 0))]

        flops = 2 * batch * howo * k1 * cp
        if with_skip:
            flops += 2 * batch * howo * xc.shape[-1] * cp
        bytes_accessed = int(xg.size * 2 + self.w1g.size * 2 +
                             (2 if with_skip else 1) * batch * howo * cp * 4)

        return pl.pallas_call(
            functools.partial(_conv1_gemm_kernel, with_skip=with_skip),
            out_shape=tuple(out_shape),
            grid_spec=pltpu.PrefetchScalarGridSpec(
                num_scalar_prefetch=0, grid=(batch, n_tiles),
                in_specs=in_specs, out_specs=out_specs),
            compiler_params=pltpu.CompilerParams(
                dimension_semantics=("parallel", "parallel"),
                vmem_limit_bytes=self.vmem_limit),
            cost_estimate=pl.CostEstimate(flops=int(flops), transcendentals=0,
                                          bytes_accessed=bytes_accessed),
        )(*args)

    def _conv_tap_call(self, xt, w, b, *, stride, tr, wo, ho, halo, ci, tpg,
                       sc=None, sh=None, ws=None, bs=None):
        cp = self.cp
        batch, n_tiles = xt.shape[0], xt.shape[1]
        rows = tr + halo
        tm = tr * wo
        fuse_bn = sc is not None
        with_skip = ws is not None

        def bcast(shape):
            return pl.BlockSpec(shape, lambda n, t: (0,) * len(shape))

        in_specs = [pl.BlockSpec((1, 1) + tuple(xt.shape[2:]),
                                 lambda n, t: (n, t, 0, 0, 0))]
        args = [xt]
        if fuse_bn:
            in_specs += [bcast(sc.shape), bcast(sh.shape)]
            args += [sc, sh]
        in_specs += [bcast(w.shape), bcast(b.shape)]
        args += [w, b]
        if with_skip:
            in_specs += [bcast(ws.shape), bcast(bs.shape)]
            args += [ws, bs]

        out_shape = [jax.ShapeDtypeStruct((batch, ho * wo, cp), jnp.float32),
                     jax.ShapeDtypeStruct((batch, n_tiles, 2, cp), jnp.float32)]
        out_specs = [pl.BlockSpec((1, tm, cp), lambda n, t: (n, t, 0)),
                     pl.BlockSpec((1, 1, 2, cp), lambda n, t: (n, t, 0, 0))]
        if with_skip:
            out_shape += [jax.ShapeDtypeStruct((batch, ho * wo, cp), jnp.float32),
                          jax.ShapeDtypeStruct((batch, n_tiles, 2, cp), jnp.float32)]
            out_specs += [pl.BlockSpec((1, tm, cp), lambda n, t: (n, t, 0)),
                          pl.BlockSpec((1, 1, 2, cp), lambda n, t: (n, t, 0, 0))]

        scratch = [pltpu.VMEM((rows, wo + halo, ci), jnp.bfloat16)] if fuse_bn else []

        kernel = functools.partial(
            _conv_tap_kernel, stride=stride, tr=tr, wo=wo, ho=ho, halo=halo,
            ci=ci, co=cp, tpg=tpg, fuse_bn=fuse_bn, with_skip=with_skip)

        flops = 2 * batch * ho * wo * 9 * ci * cp
        bytes_accessed = int(xt.size * xt.dtype.itemsize + w.size * 2 +
                             batch * ho * wo * cp * 4)

        return pl.pallas_call(
            kernel,
            out_shape=tuple(out_shape),
            grid_spec=pltpu.PrefetchScalarGridSpec(
                num_scalar_prefetch=0, grid=(batch, n_tiles),
                in_specs=in_specs, out_specs=out_specs,
                scratch_shapes=scratch),
            compiler_params=pltpu.CompilerParams(
                dimension_semantics=("parallel", "parallel"),
                vmem_limit_bytes=self.vmem_limit),
            cost_estimate=pl.CostEstimate(flops=int(flops), transcendentals=0,
                                          bytes_accessed=bytes_accessed),
        )(*args)

    def _finalize_call(self, y2, ident, sc2, sh2, scs=None, shs=None):
        rows, cp = y2.shape
        tm = _pick_rows(rows, MAX_EW_ROWS)
        row = pl.BlockSpec((tm, cp), lambda r: (r, 0))
        vec = pl.BlockSpec((1, cp), lambda r: (0, 0))
        skip_has_bn = scs is not None
        if skip_has_bn:
            in_specs = [row, row, vec, vec, vec, vec]
            args = (y2, ident, sc2, sh2, scs, shs)
        else:
            in_specs = [row, row, vec, vec]
            args = (y2, ident, sc2, sh2)
        return pl.pallas_call(
            functools.partial(_finalize_kernel, skip_has_bn=skip_has_bn),
            out_shape=jax.ShapeDtypeStruct((rows, cp), jnp.float32),
            grid_spec=pltpu.PrefetchScalarGridSpec(
                num_scalar_prefetch=0, grid=(rows // tm,),
                in_specs=in_specs, out_specs=row),
            compiler_params=pltpu.CompilerParams(
                dimension_semantics=("parallel",),
                vmem_limit_bytes=self.vmem_limit),
        )(*args)

    # ------------------------------------ forward ------------------------------------

    def __call__(self, x_nchw):
        x = jnp.transpose(x_nchw, (0, 2, 3, 1)).astype(jnp.float32)   # NCHW -> NHWC (boundary)
        batch, h, w, cin = x.shape
        s = self.stride
        cp = self.cp
        ho = (h + 2 - 3) // s + 1
        wo = (w + 2 - 3) // s + 1
        howo = ho * wo
        m_total = batch * howo

        x_bf = x.astype(jnp.bfloat16)
        xp = jnp.pad(x_bf, ((0, 0), (1, 1), (1, 1), (0, 0)))          # conv zero padding

        # ---- stage 1: conv1 (+ fused 1x1 skip conv) + bias + per-tile BN partials ----
        if self.small_cin:
            taps = [xp[:, kh:kh + (ho - 1) * s + 1:s, kw:kw + (wo - 1) * s + 1:s, :]
                    for kh in range(3) for kw in range(3)]
            xg = jnp.concatenate(taps, axis=-1).reshape(batch, howo, 9 * cin)
            xc = taps[4].reshape(batch, howo, cin) if self.has_skip_conv else None
            outs = self._conv1_gemm_call(xg, xc)
            tile1 = _pick_rows(howo, MAX_CONV_ROWS)
        else:
            halo1 = 2 // s
            tr1 = _pick_tr(ho, wo, MAX_CONV_ROWS)
            xt1 = _make_tap_tiles(xp, s, ho, wo, halo1, tr1)
            outs = self._conv_tap_call(
                xt1, self.w1g, self.b1p, stride=s, tr=tr1, wo=wo, ho=ho, halo=halo1,
                ci=cin, tpg=self.tpg1,
                ws=self.wsp if self.has_skip_conv else None,
                bs=self.bsp if self.has_skip_conv else None)
            tile1 = tr1 * wo
        if self.has_skip_conv:
            y1, st1, sp, sst = outs
        else:
            y1, st1 = outs
            sp = sst = None

        sc1, sh1 = _bn_scale_shift(st1, tile1, m_total, self.g1p, self.be1p)

        # ---- stage 2: conv2 with BN1-apply + ReLU + interior mask fused into its load path ----
        tr2 = _pick_tr(ho, wo, MAX_CONV_ROWS)
        y1p = jnp.pad(y1.reshape(batch, ho, wo, cp), ((0, 0), (1, 1), (1, 1), (0, 0)))
        y1t = _make_tap_tiles(y1p, 1, ho, wo, 2, tr2)
        y2, st2 = self._conv_tap_call(
            y1t, self.w2g, self.b2p, stride=1, tr=tr2, wo=wo, ho=ho, halo=2,
            ci=cp, tpg=self.tpg2, sc=sc1, sh=sh1)
        sc2, sh2 = _bn_scale_shift(st2, tr2 * wo, m_total, self.g2p, self.be2p)

        # ---- stage 3: BN2 + skip add + ReLU (single big-tile elementwise pass) ----
        if self.has_skip_conv:
            scs, shs = _bn_scale_shift(sst, tile1, m_total, self.gsp, self.besp)
            out = self._finalize_call(y2.reshape(m_total, cp), sp.reshape(m_total, cp),
                                      sc2, sh2, scs, shs)
        else:
            ident = jnp.pad(x, ((0, 0), (0, 0), (0, 0), (0, cp - cin))).reshape(m_total, cp)
            out = self._finalize_call(y2.reshape(m_total, cp), ident, sc2, sh2)

        out = out.reshape(batch, ho, wo, cp)[..., :self.cout]
        return jnp.transpose(out, (0, 3, 1, 2))                       # NHWC -> NCHW


# ------------- pure-JAX reference (same numerics contract: bf16 MXU inputs, f32 BN) -------------

def _ref_forward(block, x_nchw):
    x = jnp.transpose(x_nchw, (0, 2, 3, 1)).astype(jnp.float32)

    def conv3x3(inp, w, b, stride):
        y = jax.lax.conv_general_dilated(
            inp.astype(jnp.bfloat16), w.astype(jnp.bfloat16),
            window_strides=(stride, stride), padding=((1, 1), (1, 1)),
            dimension_numbers=("NHWC", "HWIO", "NHWC"),
            preferred_element_type=jnp.float32)
        return y + b.reshape(1, 1, 1, -1)

    def bn(y, g, be):
        m = jnp.mean(y, axis=(0, 1, 2), keepdims=True)
        v = jnp.mean((y - m) ** 2, axis=(0, 1, 2), keepdims=True)
        return (y - m) * jax.lax.rsqrt(v + EPS) * g.reshape(1, 1, 1, -1) + be.reshape(1, 1, 1, -1)

    a1 = jax.nn.relu(bn(conv3x3(x, block.w1, block.b1, block.stride), block.g1, block.be1))
    y2 = bn(conv3x3(a1, block.w2, block.b2, 1), block.g2, block.be2)
    if block.has_skip_conv:
        ho, wo = y2.shape[1], y2.shape[2]
        xs = x[:, ::block.stride, ::block.stride, :][:, :ho, :wo, :]
        ident = jnp.einsum("nhwc,cd->nhwd", xs.astype(jnp.bfloat16),
                           block.ws.astype(jnp.bfloat16),
                           preferred_element_type=jnp.float32) + block.bs.reshape(1, 1, 1, -1)
        ident = bn(ident, block.gs, block.bes)
    else:
        ident = x
    out = jax.nn.relu(y2 + ident)
    return jnp.transpose(out, (0, 3, 1, 2))


if __name__ == "__main__":
    n, cin, h, w = 2, 4, 16, 16
    cout, stride = 8, 2
    x = jax.random.normal(jax.random.PRNGKey(0), (n, cin, h, w), jnp.float32)   # NCHW like PyTorch

    block = ResidualBlockPallas(cin, cout, stride=stride, key=jax.random.PRNGKey(1))
    out = jax.block_until_ready(block(x))
    assert out.shape == (n, cout, h // stride, w // stride), out.shape
    ref = jax.block_until_ready(_ref_forward(block, x))
    assert bool(jnp.all(jnp.isfinite(out)))
    err = float(jnp.max(jnp.abs(out - ref)))
    assert jnp.allclose(out, ref, rtol=2e-2, atol=2e-2), err

    # also exercise the identity-skip configuration (stride=1, in_channels == out_channels)
    block2 = ResidualBlockPallas(cout, cout, stride=1, key=jax.random.PRNGKey(2))
    x2 = jax.random.normal(jax.random.PRNGKey(3), (n, cout, h, w), jnp.float32)
    out2 = jax.block_until_ready(block2(x2))
    assert out2.shape == (n, cout, h, w), out2.shape
    ref2 = jax.block_until_ready(_ref_forward(block2, x2))
    err2 = float(jnp.max(jnp.abs(out2 - ref2)))
    assert jnp.allclose(out2, ref2, rtol=2e-2, atol=2e-2), err2

    print("KERNEL_OK")
</pallas_src>

<mosaic_0001>
module attributes {stable_mosaic.version = 11 : i64} {
  func.func @_conv1_gemm_kernel(%arg0: i32, %arg1: i32, %arg2: memref<1x64x36xbf16, #tpu.memory_space<vmem>>, %arg3: memref<36x128xbf16, #tpu.memory_space<vmem>>, %arg4: memref<1x128xf32, #tpu.memory_space<vmem>>, %arg5: memref<1x64x4xbf16, #tpu.memory_space<vmem>>, %arg6: memref<4x128xbf16, #tpu.memory_space<vmem>>, %arg7: memref<1x128xf32, #tpu.memory_space<vmem>>, %arg8: memref<1x64x128xf32, #tpu.memory_space<vmem>>, %arg9: memref<1x1x2x128xf32, #tpu.memory_space<vmem>>, %arg10: memref<1x64x128xf32, #tpu.memory_space<vmem>>, %arg11: memref<1x1x2x128xf32, #tpu.memory_space<vmem>>) attributes {dimension_semantics = [#tpu.dimension_semantics<parallel>, #tpu.dimension_semantics<parallel>], iteration_bounds = array<i64: 2, 1>, scalar_prefetch = 0 : i64, scratch_operands = 0 : i64, tpu.core_type = #tpu.core_type<tc>, window_params = [{transform_indices = @transform_0, window_bounds = array<i64: 1, 64, 36>}, {pipeline_mode = #tpu.pipeline_mode<synchronous>, transform_indices = @transform_1, window_bounds = array<i64: 36, 128>}, {pipeline_mode = #tpu.pipeline_mode<synchronous>, transform_indices = @transform_2, window_bounds = array<i64: 1, 128>}, {transform_indices = @transform_3, window_bounds = array<i64: 1, 64, 4>}, {pipeline_mode = #tpu.pipeline_mode<synchronous>, transform_indices = @transform_4, window_bounds = array<i64: 4, 128>}, {pipeline_mode = #tpu.pipeline_mode<synchronous>, transform_indices = @transform_5, window_bounds = array<i64: 1, 128>}, {transform_indices = @transform_6, window_bounds = array<i64: 1, 64, 128>}, {transform_indices = @transform_7, window_bounds = array<i64: 1, 1, 2, 128>}, {transform_indices = @transform_8, window_bounds = array<i64: 1, 64, 128>}, {transform_indices = @transform_9, window_bounds = array<i64: 1, 1, 2, 128>}]} {
    %c0 = arith.constant 0 : index
    %c0_0 = arith.constant 0 : index
    %c0_1 = arith.constant 0 : index
    %0 = vector.load %arg2[%c0, %c0_0, %c0_1] : memref<1x64x36xbf16, #tpu.memory_space<vmem>>, vector<1x64x36xbf16>
    %1 = vector.shape_cast %0 : vector<1x64x36xbf16> to vector<64x36xbf16>
    %c0_2 = arith.constant 0 : index
    %c0_3 = arith.constant 0 : index
    %2 = vector.load %arg3[%c0_2, %c0_3] : memref<36x128xbf16, #tpu.memory_space<vmem>>, vector<36x128xbf16>
    %cst = arith.constant dense<0.000000e+00> : vector<64x128xf32>
    %3 = tpu.matmul %1, %2, %cst {dimension_numbers = #tpu.dot_dimension_numbers<[1], [0], [0], [1], [0, 0, 1, 1], [], []>} : vector<64x36xbf16>, vector<36x128xbf16>, vector<64x128xf32> -> vector<64x128xf32>
    %c0_4 = arith.constant 0 : index
    %c0_5 = arith.constant 0 : index
    %4 = vector.load %arg4[%c0_4, %c0_5] : memref<1x128xf32, #tpu.memory_space<vmem>>, vector<1x128xf32>
    %5 = vector.broadcast %4 : vector<1x128xf32> to vector<64x128xf32>
    %6 = arith.addf %3, %5 : vector<64x128xf32>
    %c0_6 = arith.constant 0 : index
    %c0_7 = arith.constant 0 : index
    %c0_8 = arith.constant 0 : index
    %7 = vector.load %arg8[%c0_6, %c0_7, %c0_8] : memref<1x64x128xf32, #tpu.memory_space<vmem>>, vector<1x64x128xf32>
    %8 = vector.shape_cast %7 : vector<1x64x128xf32> to vector<64x128xf32>
    %9 = vector.shape_cast %6 : vector<64x128xf32> to vector<1x64x128xf32>
    tpu.vector_store %arg8[%c0_6, %c0_7, %c0_8], %9 {strides = array<i32>} : memref<1x64x128xf32, #tpu.memory_space<vmem>>, vector<1x64x128xf32>,
    %cst_9 = arith.constant dense<0.000000e+00> : vector<128xf32>
    %10 = vector.multi_reduction <add>, %6, %cst_9 [0] : vector<64x128xf32> to vector<128xf32>
    %11 = vector.shape_cast %10 : vector<128xf32> to vector<1x128xf32>
    %cst_10 = arith.constant 1.562500e-02 : f32
    %12 = vector.broadcast %cst_10 : f32 to vector<1x128xf32>
    %13 = arith.mulf %11, %12 : vector<1x128xf32>
    %14 = vector.broadcast %13 : vector<1x128xf32> to vector<64x128xf32>
    %15 = arith.subf %6, %14 : vector<64x128xf32>
    %16 = arith.mulf %15, %15 : vector<64x128xf32>
    %cst_11 = arith.constant dense<0.000000e+00> : vector<128xf32>
    %17 = vector.multi_reduction <add>, %16, %cst_11 [0] : vector<64x128xf32> to vector<128xf32>
    %18 = vector.shape_cast %17 : vector<128xf32> to vector<1x128xf32>
    %19 = tpu.concatenate %11, %18 in 0 : vector<1x128xf32>, vector<1x128xf32> -> vector<2x128xf32>
    %c0_12 = arith.constant 0 : index
    %c0_13 = arith.constant 0 : index
    %c0_14 = arith.constant 0 : index
    %c0_15 = arith.constant 0 : index
    %20 = vector.load %arg9[%c0_12, %c0_13, %c0_14, %c0_15] : memref<1x1x2x128xf32, #tpu.memory_space<vmem>>, vector<1x1x2x128xf32>
    %21 = vector.shape_cast %20 : vector<1x1x2x128xf32> to vector<2x128xf32>
    %22 = vector.shape_cast %19 : vector<2x128xf32> to vector<1x1x2x128xf32>
    tpu.vector_store %arg9[%c0_12, %c0_13, %c0_14, %c0_15], %22 {strides = array<i32>} : memref<1x1x2x128xf32, #tpu.memory_space<vmem>>, vector<1x1x2x128xf32>,
    %c0_16 = arith.constant 0 : index
    %c0_17 = arith.constant 0 : index
    %c0_18 = arith.constant 0 : index
    %23 = vector.load %arg5[%c0_16, %c0_17, %c0_18] : memref<1x64x4xbf16, #tpu.memory_space<vmem>>, vector<1x64x4xbf16>
    %24 = vector.shape_cast %23 : vector<1x64x4xbf16> to vector<64x4xbf16>
    %c0_19 = arith.constant 0 : index
    %c0_20 = arith.constant 0 : index
    %25 = vector.load %arg6[%c0_19, %c0_20] : memref<4x128xbf16, #tpu.memory_space<vmem>>, vector<4x128xbf16>
    %cst_21 = arith.constant dense<0.000000e+00> : vector<64x128xf32>
    %26 = tpu.matmul %24, %25, %cst_21 {dimension_numbers = #tpu.dot_dimension_numbers<[1], [0], [0], [1], [0, 0, 1, 1], [], []>} : vector<64x4xbf16>, vector<4x128xbf16>, vector<64x128xf32> -> vector<64x128xf32>
    %c0_22 = arith.constant 0 : index
    %c0_23 = arith.constant 0 : index
    %27 = vector.load %arg7[%c0_22, %c0_23] : memref<1x128xf32, #tpu.memory_space<vmem>>, vector<1x128xf32>
    %28 = vector.broadcast %27 : vector<1x128xf32> to vector<64x128xf32>
    %29 = arith.addf %26, %28 : vector<64x128xf32>
    %c0_24 = arith.constant 0 : index
    %c0_25 = arith.constant 0 : index
    %c0_26 = arith.constant 0 : index
    %30 = vector.load %arg10[%c0_24, %c0_25, %c0_26] : memref<1x64x128xf32, #tpu.memory_space<vmem>>, vector<1x64x128xf32>
    %31 = vector.shape_cast %30 : vector<1x64x128xf32> to vector<64x128xf32>
    %32 = vector.shape_cast %29 : vector<64x128xf32> to vector<1x64x128xf32>
    tpu.vector_store %arg10[%c0_24, %c0_25, %c0_26], %32 {strides = array<i32>} : memref<1x64x128xf32, #tpu.memory_space<vmem>>, vector<1x64x128xf32>,
    %cst_27 = arith.constant dense<0.000000e+00> : vector<128xf32>
    %33 = vector.multi_reduction <add>, %29, %cst_27 [0] : vector<64x128xf32> to vector<128xf32>
    %34 = vector.shape_cast %33 : vector<128xf32> to vector<1x128xf32>
    %cst_28 = arith.constant 1.562500e-02 : f32
    %35 = vector.broadcast %cst_28 : f32 to vector<1x128xf32>
    %36 = arith.mulf %34, %35 : vector<1x128xf32>
    %37 = vector.broadcast %36 : vector<1x128xf32> to vector<64x128xf32>
    %38 = arith.subf %29, %37 : vector<64x128xf32>
    %39 = arith.mulf %38, %38 : vector<64x128xf32>
    %cst_29 = arith.constant dense<0.000000e+00> : vector<128xf32>
    %40 = vector.multi_reduction <add>, %39, %cst_29 [0] : vector<64x128xf32> to vector<128xf32>
    %41 = vector.shape_cast %40 : vector<128xf32> to vector<1x128xf32>
    %42 = tpu.concatenate %34, %41 in 0 : vector<1x128xf32>, vector<1x128xf32> -> vector<2x128xf32>
    %c0_30 = arith.constant 0 : index
    %c0_31 = arith.constant 0 : index
    %c0_32 = arith.constant 0 : index
    %c0_33 = arith.constant 0 : index
    %43 = vector.load %arg11[%c0_30, %c0_31, %c0_32, %c0_33] : memref<1x1x2x128xf32, #tpu.memory_space<vmem>>, vector<1x1x2x128xf32>
    %44 = vector.shape_cast %43 : vector<1x1x2x128xf32> to vector<2x128xf32>
    %45 = vector.shape_cast %42 : vector<2x128xf32> to vector<1x1x2x128xf32>
    tpu.vector_store %arg11[%c0_30, %c0_31, %c0_32, %c0_33], %45 {strides = array<i32>} : memref<1x1x2x128xf32, #tpu.memory_space<vmem>>, vector<1x1x2x128xf32>,
    return
  }
  func.func @transform_0(%arg0: i32, %arg1: i32) -> (i32, i32, i32) {
    %c0_i32 = arith.constant 0 : i32
    %c0_i32_0 = arith.constant 0 : i32
    return %arg0, %arg1, %c0_i32 : i32, i32, i32
  }
  func.func @transform_1(%arg0: i32, %arg1: i32) -> (i32, i32) {
    %c0_i32 = arith.constant 0 : i32
    %c0_i32_0 = arith.constant 0 : i32
    %c0_i32_1 = arith.constant 0 : i32
    return %c0_i32, %c0_i32_0 : i32, i32
  }
  func.func @transform_2(%arg0: i32, %arg1: i32) -> (i32, i32) {
    %c0_i32 = arith.constant 0 : i32
    %c0_i32_0 = arith.constant 0 : i32
    %c0_i32_1 = arith.constant 0 : i32
    return %c0_i32, %c0_i32_0 : i32, i32
  }
  func.func @transform_3(%arg0: i32, %arg1: i32) -> (i32, i32, i32) {
    %c0_i32 = arith.constant 0 : i32
    %c0_i32_0 = arith.constant 0 : i32
    return %arg0, %arg1, %c0_i32 : i32, i32, i32
  }
  func.func @transform_4(%arg0: i32, %arg1: i32) -> (i32, i32) {
    %c0_i32 = arith.constant 0 : i32
    %c0_i32_0 = arith.constant 0 : i32
    %c0_i32_1 = arith.constant 0 : i32
    return %c0_i32, %c0_i32_0 : i32, i32
  }
  func.func @transform_5(%arg0: i32, %arg1: i32) -> (i32, i32) {
    %c0_i32 = arith.constant 0 : i32
    %c0_i32_0 = arith.constant 0 : i32
    %c0_i32_1 = arith.constant 0 : i32
    return %c0_i32, %c0_i32_0 : i32, i32
  }
  func.func @transform_6(%arg0: i32, %arg1: i32) -> (i32, i32, i32) {
    %c0_i32 = arith.constant 0 : i32
    %c0_i32_0 = arith.constant 0 : i32
    return %arg0, %arg1, %c0_i32 : i32, i32, i32
  }
  func.func @transform_7(%arg0: i32, %arg1: i32) -> (i32, i32, i32, i32) {
    %c0_i32 = arith.constant 0 : i32
    %c0_i32_0 = arith.constant 0 : i32
    %c0_i32_1 = arith.constant 0 : i32
    return %arg0, %arg1, %c0_i32, %c0_i32_0 : i32, i32, i32, i32
  }
  func.func @transform_8(%arg0: i32, %arg1: i32) -> (i32, i32, i32) {
    %c0_i32 = arith.constant 0 : i32
    %c0_i32_0 = arith.constant 0 : i32
    return %arg0, %arg1, %c0_i32 : i32, i32, i32
  }
  func.func @transform_9(%arg0: i32, %arg1: i32) -> (i32, i32, i32, i32) {
    %c0_i32 = arith.constant 0 : i32
    %c0_i32_0 = arith.constant 0 : i32
    %c0_i32_1 = arith.constant 0 : i32
    return %arg0, %arg1, %c0_i32, %c0_i32_0 : i32, i32, i32, i32
  }
}

</mosaic_0001>

<llo_original>
// kernel: tpu_custom_call.1
$region0: #{tpu_custom_call.1}
  #allocation0 [shape = 'u32[]', space=smem, size = 0x4, offset = 0x4, fixed_abs, tag = 'smem constant byte address 0x4 - core index']
  #allocation1 [shape = 'u32[144,128]{1,0:T(1,128)}', space=vmem, size = 0x12000, scoped, tag = 'internal scratch']
  %s0 = inlined_call_operand.vmem [shape: bf16[2,64,36], index: 0, kind: input, shape index: {}]
  %s1 = inlined_call_operand.vmem [shape: bf16[36,128], index: 1, kind: input, shape index: {}]
  %s2 = inlined_call_operand.vmem [shape: f32[1,128], index: 2, kind: input, shape index: {}]
  %s3 = inlined_call_operand.vmem [shape: bf16[2,64,4], index: 3, kind: input, shape index: {}]
  %s4 = inlined_call_operand.vmem [shape: bf16[4,128], index: 4, kind: input, shape index: {}]
  %s5 = inlined_call_operand.vmem [shape: f32[1,128], index: 5, kind: input, shape index: {}]
  %s6 = inlined_call_operand.hbm [shape: f32[2,64,128], index: 6, kind: output, shape index: {0}]
  %s7 = inlined_call_operand.hbm [shape: f32[2,1,2,128], index: 7, kind: output, shape index: {1}]
  %s8 = inlined_call_operand.hbm [shape: f32[2,64,128], index: 8, kind: output, shape index: {2}]
  %s9 = inlined_call_operand.hbm [shape: f32[2,1,2,128], index: 9, kind: output, shape index: {3}]
  %10 = xla_tuple %s6, %s7, %s8, %s9
  %s11 = sld [smem:[#allocation0]]
  $region81: #{tpu_custom_call.1} parent=0
    _
  %s13 = ssub.s32 1, %s11
  %s14 = scalar_select 0, %s13, %s11
  $region1: #{tpu_custom_call.1} parent=0
    #allocation2 [shape = 'u8[65536]{0}', space=vmem, size = 0x10000, scoped, tag = 'output window, operand 0']
    #allocation3 [shape = 's32[2]{0}', space=sflag, size = 0x8, scoped, tag = 'scoped memory for tpu_custom_call.1']
    #allocation4 [shape = 'u8[2048]{0}', space=vmem, size = 0x800, scoped, tag = 'output window, operand 1']
    #allocation5 [shape = 's32[2]{0}', space=sflag, size = 0x8, scoped, tag = 'scoped memory for tpu_custom_call.1']
    #allocation6 [shape = 'u8[65536]{0}', space=vmem, size = 0x10000, scoped, tag = 'output window, operand 2']
    #allocation7 [shape = 'u8[2048]{0}', space=vmem, size = 0x800, scoped, tag = 'output window, operand 3']
    #allocation8 [shape = 's32[2]{0}', space=sflag, size = 0x8, scoped, tag = 'scoped memory for tpu_custom_call.1']
    %15 = vsyncpa [#allocation3], 0
    %s16 = scalar_lea.sflag [#allocation3], 1
    %17 = vsyncpa %s16, 0
    %18 = vsyncpa [#allocation5], 0
    %s19 = scalar_lea.sflag [#allocation5], 1
    %20 = vsyncpa %s19, 0
    %21 = vsyncpa [#allocation8], 0
    %s22 = scalar_lea.sflag [#allocation8], 1
    %23 = vsyncpa %s22, 0
    loop: start=0, step=1, limit=4
    $region2: #{tpu_custom_call.1} parent=1 // loop_pre_header
      _
    $region3: #{tpu_custom_call.1} parent=1 // loop_header
      %s25 = sphi 0, %s29
      %p26 = scmp.ge.s32.totalorder %s25, 4
      %s32 = sphi 0, %s44
      %s33 = sphi 0, %s40
      %s34 = sphi 0, %s32
      %s35 = sphi 0, %s33
      %s36 = sphi 0, %s34
      %s37 = sphi 0, %s35
      %s49 = sphi 0, %s51
      %s52 = sphi 0, %s49
      %s53 = sphi 0, %s52
      %s69 = sphi 0, %s53
      %s73 = sphi 0, %s73
      %s75 = sphi 0, %s73
      %s76 = sphi 0, %s75
      %s90 = sphi 0, %s76
      %s94 = sphi 0, %s94
      %s96 = sphi 0, %s94
      %s97 = sphi 0, %s96
      %s111 = sphi 0, %s97
      %s119 = sphi 0, %s121
      %s122 = sphi 0, %s119
      %s123 = sphi 0, %s122
      %s139 = sphi 0, %s123
      %s143 = sphi 0, %s143
      %s145 = sphi 0, %s143
      %s146 = sphi 0, %s145
      %s160 = sphi 0, %s146
      %s164 = sphi 0, %s164
      %s166 = sphi 0, %s164
      %s167 = sphi 0, %s166
      %s181 = sphi 0, %s167
      %s189 = sphi 0, %s191
      %s192 = sphi 0, %s189
      %s193 = sphi 0, %s192
      %s209 = sphi 0, %s193
      %s217 = sphi 0, %s219
      %s220 = sphi 0, %s217
      %s221 = sphi 0, %s220
      %s237 = sphi 0, %s221
      %s245 = sphi 0, %s247
      %s248 = sphi 0, %s245
      %s249 = sphi 0, %s248
      %s265 = sphi 0, %s249
      %s273 = sphi 0, %s275
      %s276 = sphi 0, %s273
      %s277 = sphi 0, %s276
      %s293 = sphi 0, %s277
    $region4: #{tpu_custom_call.1} parent=1 // loop_header_branch
      %28 = sbr.rel (%p26) target = $region8
    $region5: #{tpu_custom_call.1} parent=1 // loop_body
      %s30 = ssub.s32 %s25, 1
      %s31 = ssub.s32 %s25, 2
      %s38 = sadd.s32 1, %s33
      %p39 = scmp.ge.s32.totalorder %s38, 1
      %s40 = scalar_select %p39, 0, %s38
      %s41 = sadd.s32 1, %s32
      %s42 = scalar_select %p39, %s41, %s32
      %p43 = scmp.ge.s32.totalorder %s42, 2
      %s44 = scalar_select %p43, 0, %s42
      %s45 = ssub.s32 %s32, %s44
      %s46 = ssub.s32 %s33, %s40
      %s47 = sor.u32 %s45, %s46
      %p48 = scmp.eq.s32.totalorder %s47, 0
      %s50 = sadd.s32 %s49, 1
      %s51 = scalar_select %p48, %s49, %s50
      %p54 = pneg %p48
      %p55 = scmp.eq.s32.totalorder %s25, 1
      %p56 = por %p54, %p55
      %p57 = scmp.ne.s32.totalorder %s49, %s52
      %p58 = scmp.eq.s32.totalorder %s25, 0
      %p59 = por %p57, %p58
      %p60 = scmp.ne.s32.totalorder %s49, %s52
      %p61 = scmp.eq.s32.totalorder %s30, 1
      %p62 = por %p60, %p61
      %p63 = scmp.ne.s32.totalorder %s52, %s53
      %p64 = scmp.eq.s32.totalorder %s30, 0
      %p65 = por %p63, %p64
      %p66 = scmp.ne.s32.totalorder %s52, %s53
      %p67 = scmp.eq.s32.totalorder %s31, 1
      %p68 = por %p66, %p67
      %p70 = scmp.ne.s32.totalorder %s53, %s69
      %p71 = scmp.eq.s32.totalorder %s31, 0
      %p72 = por %p70, %p71
      %s74 = sadd.s32 %s73, 1
      %p77 = scmp.eq.s32.totalorder %s25, 1
      %p78 = scmp.ne.s32.totalorder %s73, %s75
      %p79 = scmp.eq.s32.totalorder %s25, 0
      %p80 = por %p78, %p79
      %p81 = scmp.ne.s32.totalorder %s73, %s75
      %p82 = scmp.eq.s32.totalorder %s30, 1
      %p83 = por %p81, %p82
      %p84 = scmp.ne.s32.totalorder %s75, %s76
      %p85 = scmp.eq.s32.totalorder %s30, 0
      %p86 = por %p84, %p85
      %p87 = scmp.ne.s32.totalorder %s75, %s76
      %p88 = scmp.eq.s32.totalorder %s31, 1
      %p89 = por %p87, %p88
      %p91 = scmp.ne.s32.totalorder %s76, %s90
      %p92 = scmp.eq.s32.totalorder %s31, 0
      %p93 = por %p91, %p92
      %s95 = sadd.s32 %s94, 1
      %p98 = scmp.eq.s32.totalorder %s25, 1
      %p99 = scmp.ne.s32.totalorder %s94, %s96
      %p100 = scmp.eq.s32.totalorder %s25, 0
      %p101 = por %p99, %p100
      %p102 = scmp.ne.s32.totalorder %s94, %s96
      %p103 = scmp.eq.s32.totalorder %s30, 1
      %p104 = por %p102, %p103
      %p105 = scmp.ne.s32.totalorder %s96, %s97
      %p106 = scmp.eq.s32.totalorder %s30, 0
      %p107 = por %p105, %p106
      %p108 = scmp.ne.s32.totalorder %s96, %s97
      %p109 = scmp.eq.s32.totalorder %s31, 1
      %p110 = por %p108, %p109
      %p112 = scmp.ne.s32.totalorder %s97, %s111
      %p113 = scmp.eq.s32.totalorder %s31, 0
      %p114 = por %p112, %p113
      %s115 = ssub.s32 %s32, %s44
      %s116 = ssub.s32 %s33, %s40
      %s117 = sor.u32 %s115, %s116
      %p118 = scmp.eq.s32.totalorder %s117, 0
      %s120 = sadd.s32 %s119, 1
      %s121 = scalar_select %p118, %s119, %s120
      %p124 = pneg %p118
      %p125 = scmp.eq.s32.totalorder %s25, 1
      %p126 = por %p124, %p125
      %p127 = scmp.ne.s32.totalorder %s119, %s122
      %p128 = scmp.eq.s32.totalorder %s25, 0
      %p129 = por %p127, %p128
      %p130 = scmp.ne.s32.totalorder %s119, %s122
      %p131 = scmp.eq.s32.totalorder %s30, 1
      %p132 = por %p130, %p131
      %p133 = scmp.ne.s32.totalorder %s122, %s123
      %p134 = scmp.eq.s32.totalorder %s30, 0
      %p135 = por %p133, %p134
      %p136 = scmp.ne.s32.totalorder %s122, %s123
      %p137 = scmp.eq.s32.totalorder %s31, 1
      %p138 = por %p136, %p137
      %p140 = scmp.ne.s32.totalorder %s123, %s139
      %p141 = scmp.eq.s32.totalorder %s31, 0
      %p142 = por %p140, %p141
      %s144 = sadd.s32 %s143, 1
      %p147 = scmp.eq.s32.totalorder %s25, 1
      %p148 = scmp.ne.s32.totalorder %s143, %s145
      %p149 = scmp.eq.s32.totalorder %s25, 0
      %p150 = por %p148, %p149
      %p151 = scmp.ne.s32.totalorder %s143, %s145
      %p152 = scmp.eq.s32.totalorder %s30, 1
      %p153 = por %p151, %p152
      %p154 = scmp.ne.s32.totalorder %s145, %s146
      %p155 = scmp.eq.s32.totalorder %s30, 0
      %p156 = por %p154, %p155
      %p157 = scmp.ne.s32.totalorder %s145, %s146
      %p158 = scmp.eq.s32.totalorder %s31, 1
      %p159 = por %p157, %p158
      %p161 = scmp.ne.s32.totalorder %s146, %s160
      %p162 = scmp.eq.s32.totalorder %s31, 0
      %p163 = por %p161, %p162
      %s165 = sadd.s32 %s164, 1
      %p168 = scmp.eq.s32.totalorder %s25, 1
      %p169 = scmp.ne.s32.totalorder %s164, %s166
      %p170 = scmp.eq.s32.totalorder %s25, 0
      %p171 = por %p169, %p170
      %p172 = scmp.ne.s32.totalorder %s164, %s166
      %p173 = scmp.eq.s32.totalorder %s30, 1
      %p174 = por %p172, %p173
      %p175 = scmp.ne.s32.totalorder %s166, %s167
      %p176 = scmp.eq.s32.totalorder %s30, 0
      %p177 = por %p175, %p176
      %p178 = scmp.ne.s32.totalorder %s166, %s167
      %p179 = scmp.eq.s32.totalorder %s31, 1
      %p180 = por %p178, %p179
      %p182 = scmp.ne.s32.totalorder %s167, %s181
      %p183 = scmp.eq.s32.totalorder %s31, 0
      %p184 = por %p182, %p183
      %s185 = ssub.s32 %s32, %s44
      %s186 = ssub.s32 %s33, %s40
      %s187 = sor.u32 %s185, %s186
      %p188 = scmp.eq.s32.totalorder %s187, 0
      %s190 = sadd.s32 %s189, 1
      %s191 = scalar_select %p188, %s189, %s190
      %p194 = pneg %p188
      %p195 = scmp.eq.s32.totalorder %s25, 1
      %p196 = por %p194, %p195
      %p197 = scmp.ne.s32.totalorder %s189, %s192
      %p198 = scmp.eq.s32.totalorder %s25, 0
      %p199 = por %p197, %p198
      %p200 = scmp.ne.s32.totalorder %s189, %s192
      %p201 = scmp.eq.s32.totalorder %s30, 1
      %p202 = por %p200, %p201
      %p203 = scmp.ne.s32.totalorder %s192, %s193
      %p204 = scmp.eq.s32.totalorder %s30, 0
      %p205 = por %p203, %p204
      %p206 = scmp.ne.s32.totalorder %s192, %s193
      %p207 = scmp.eq.s32.totalorder %s31, 1
      %p208 = por %p206, %p207
      %p210 = scmp.ne.s32.totalorder %s193, %s209
      %p211 = scmp.eq.s32.totalorder %s31, 0
      %p212 = por %p210, %p211
      %s213 = ssub.s32 %s32, %s44
      %s214 = ssub.s32 %s33, %s40
      %s215 = sor.u32 %s213, %s214
      %p216 = scmp.eq.s32.totalorder %s215, 0
      %s218 = sadd.s32 %s217, 1
      %s219 = scalar_select %p216, %s217, %s218
      %p222 = pneg %p216
      %p223 = scmp.eq.s32.totalorder %s25, 1
      %p224 = por %p222, %p223
      %p225 = scmp.ne.s32.totalorder %s217, %s220
      %p226 = scmp.eq.s32.totalorder %s25, 0
      %p227 = por %p225, %p226
      %p228 = scmp.ne.s32.totalorder %s217, %s220
      %p229 = scmp.eq.s32.totalorder %s30, 1
      %p230 = por %p228, %p229
      %p231 = scmp.ne.s32.totalorder %s220, %s221
      %p232 = scmp.eq.s32.totalorder %s30, 0
      %p233 = por %p231, %p232
      %p234 = scmp.ne.s32.totalorder %s220, %s221
      %p235 = scmp.eq.s32.totalorder %s31, 1
      %p236 = por %p234, %p235
      %p238 = scmp.ne.s32.totalorder %s221, %s237
      %p239 = scmp.eq.s32.totalorder %s31, 0
      %p240 = por %p238, %p239
      %s241 = ssub.s32 %s32, %s44
      %s242 = ssub.s32 %s33, %s40
      %s243 = sor.u32 %s241, %s242
      %p244 = scmp.eq.s32.totalorder %s243, 0
      %s246 = sadd.s32 %s245, 1
      %s247 = scalar_select %p244, %s245, %s246
      %p250 = pneg %p244
      %p251 = scmp.eq.s32.totalorder %s25, 1
      %p252 = por %p250, %p251
      %p253 = scmp.ne.s32.totalorder %s245, %s248
      %p254 = scmp.eq.s32.totalorder %s25, 0
      %p255 = por %p253, %p254
      %p256 = scmp.ne.s32.totalorder %s245, %s248
      %p257 = scmp.eq.s32.totalorder %s30, 1
      %p258 = por %p256, %p257
      %p259 = scmp.ne.s32.totalorder %s248, %s249
      %p260 = scmp.eq.s32.totalorder %s30, 0
      %p261 = por %p259, %p260
      %p262 = scmp.ne.s32.totalorder %s248, %s249
      %p263 = scmp.eq.s32.totalorder %s31, 1
      %p264 = por %p262, %p263
      %p266 = scmp.ne.s32.totalorder %s249, %s265
      %p267 = scmp.eq.s32.totalorder %s31, 0
      %p268 = por %p266, %p267
      %s269 = ssub.s32 %s32, %s44
      %s270 = ssub.s32 %s33, %s40
      %s271 = sor.u32 %s269, %s270
      %p272 = scmp.eq.s32.totalorder %s271, 0
      %s274 = sadd.s32 %s273, 1
      %s275 = scalar_select %p272, %s273, %s274
      %p278 = pneg %p272
      %p279 = scmp.eq.s32.totalorder %s25, 1
      %p280 = por %p278, %p279
      %p281 = scmp.ne.s32.totalorder %s273, %s276
      %p282 = scmp.eq.s32.totalorder %s25, 0
      %p283 = por %p281, %p282
      %p284 = scmp.ne.s32.totalorder %s273, %s276
      %p285 = scmp.eq.s32.totalorder %s30, 1
      %p286 = por %p284, %p285
      %p287 = scmp.ne.s32.totalorder %s276, %s277
      %p288 = scmp.eq.s32.totalorder %s30, 0
      %p289 = por %p287, %p288
      %p290 = scmp.ne.s32.totalorder %s276, %s277
      %p291 = scmp.eq.s32.totalorder %s31, 1
      %p292 = por %p290, %p291
      %p294 = scmp.ne.s32.totalorder %s277, %s293
      %p295 = scmp.eq.s32.totalorder %s31, 0
      %p296 = por %p294, %p295
      %p297 = scmp.le.s32.totalorder 1, %s25
      %p298 = scmp.lt.s32.totalorder %s25, 3
      %p299 = pnand %p297, %p298
      %p300 = pneg %p299
      // Predicated region
      $region9: #{tpu_custom_call.1} parent=5 // pred_check
        _
      $region10: #{tpu_custom_call.1} parent=5 // pred_check_branch
        %302 = sbr.rel (%p299) target = $region12
      $region11: #{tpu_custom_call.1} parent=5 // pred_region
        %s303 = ssub.s32 %s25, 1
        // Predicated region
        $region13: #{tpu_custom_call.1} parent=11 // pred_check
          %p304 = pneg %p86
        $region14: #{tpu_custom_call.1} parent=11 // pred_check_branch
          %306 = sbr.rel (%p304) target = $region16
        $region15: #{tpu_custom_call.1} parent=11 // pred_region
          _
        $region16: #{tpu_custom_call.1} parent=11 // pred_fallthru
          _
        // Predicated region
        $region17: #{tpu_custom_call.1} parent=11 // pred_check
          %p307 = pneg %p107
        $region18: #{tpu_custom_call.1} parent=11 // pred_check_branch
          %309 = sbr.rel (%p307) target = $region20
        $region19: #{tpu_custom_call.1} parent=11 // pred_region
          _
        $region20: #{tpu_custom_call.1} parent=11 // pred_fallthru
          _
        // Predicated region
        $region21: #{tpu_custom_call.1} parent=11 // pred_check
          %p310 = pneg %p156
        $region22: #{tpu_custom_call.1} parent=11 // pred_check_branch
          %312 = sbr.rel (%p310) target = $region24
        $region23: #{tpu_custom_call.1} parent=11 // pred_region
          _
        $region24: #{tpu_custom_call.1} parent=11 // pred_fallthru
          _
        // Predicated region
        $region25: #{tpu_custom_call.1} parent=11 // pred_check
          %p313 = pneg %p177
        $region26: #{tpu_custom_call.1} parent=11 // pred_check_branch
          %315 = sbr.rel (%p313) target = $region28
        $region27: #{tpu_custom_call.1} parent=11 // pred_region
          _
        $region28: #{tpu_custom_call.1} parent=11 // pred_fallthru
          _
      $region12: #{tpu_custom_call.1} parent=5 // pred_fallthru
        _
      %p316 = scmp.lt.s32.totalorder %s25, 2
      // Predicated region
      $region29: #{tpu_custom_call.1} parent=5 // pred_check
        %p317 = pneg %p316
      $region30: #{tpu_custom_call.1} parent=5 // pred_check_branch
        %319 = sbr.rel (%p317) target = $region32
      $region31: #{tpu_custom_call.1} parent=5 // pred_region
        // Predicated region
        $region33: #{tpu_custom_call.1} parent=31 // pred_check
          %p320 = pneg %p59
        $region34: #{tpu_custom_call.1} parent=31 // pred_check_branch
          %322 = sbr.rel (%p320) target = $region36
        $region35: #{tpu_custom_call.1} parent=31 // pred_region
          %s323 = smul.u32 8, %s33
          %p324 = scmp.lt.s32.totalorder %s32, 1
          %s325 = scalar_select %p324, %s32, 1
          %p326 = scmp.lt.s32.totalorder %s323, 7
          %s327 = scalar_select %p326, %s323, 7
          %s328 = smul.addr %s325, 8
          %s329 = sadd.s32 %s327, %s328
          %s330 = smul.addr %s329, 4
          %s331 = scalar_lea.vmem %s0, %s330
          %s332 = smul.u32 8, %s33
        $region36: #{tpu_custom_call.1} parent=31 // pred_fallthru
          _
        // Predicated region
        $region37: #{tpu_custom_call.1} parent=31 // pred_check
          %p333 = pneg %p129
        $region38: #{tpu_custom_call.1} parent=31 // pred_check_branch
          %335 = sbr.rel (%p333) target = $region40
        $region39: #{tpu_custom_call.1} parent=31 // pred_region
          %s336 = smul.u32 8, %s33
          %p337 = scmp.lt.s32.totalorder %s32, 1
          %s338 = scalar_select %p337, %s32, 1
          %p339 = scmp.lt.s32.totalorder %s336, 7
          %s340 = scalar_select %p339, %s336, 7
          %s341 = smul.addr %s338, 8
          %s342 = sadd.s32 %s340, %s341
          %s343 = smul.addr %s342, 4
          %s344 = scalar_lea.vmem %s3, %s343
          %s345 = smul.u32 8, %s33
        $region40: #{tpu_custom_call.1} parent=31 // pred_fallthru
          _
      $region32: #{tpu_custom_call.1} parent=5 // pred_fallthru
        _
      %p346 = scmp.le.s32.totalorder 1, %s25
      %p347 = scmp.lt.s32.totalorder %s25, 3
      %p348 = pnand %p346, %p347
      %p349 = pneg %p348
      // Predicated region
      $region41: #{tpu_custom_call.1} parent=5 // pred_check
        _
      $region42: #{tpu_custom_call.1} parent=5 // pred_check_branch
        %351 = sbr.rel (%p348) target = $region44
      $region43: #{tpu_custom_call.1} parent=5 // pred_region
        %s352 = ssub.s32 %s25, 1
        %s353 = smul.u32 8, %s35
        %p354 = scmp.lt.s32.totalorder %s34, 1
        %s355 = scalar_select %p354, %s34, 1
        %p356 = scmp.lt.s32.totalorder %s353, 7
        %s357 = scalar_select %p356, %s353, 7
        %s358 = smul.addr %s355, 8
        %s359 = sadd.s32 %s357, %s358
        %s360 = smul.addr %s359, 4
        %s361 = scalar_lea.vmem %s0, %s360
        %p362 = pneg %p65
        %p363 = pneg %p62
        %p364 = pneg %p86
        %p365 = pneg %p83
        %p366 = pneg %p107
        %p367 = pneg %p104
        %s368 = smul.u32 8, %s35
        %p369 = scmp.lt.s32.totalorder %s34, 1
        %s370 = scalar_select %p369, %s34, 1
        %p371 = scmp.lt.s32.totalorder %s368, 7
        %s372 = scalar_select %p371, %s368, 7
        %s373 = smul.addr %s370, 8
        %s374 = sadd.s32 %s372, %s373
        %s375 = smul.addr %s374, 4
        %s376 = scalar_lea.vmem %s3, %s375
        %p377 = pneg %p135
        %p378 = pneg %p132
        %p379 = pneg %p156
        %p380 = pneg %p153
        %p381 = pneg %p177
        %p382 = pneg %p174
        %p383 = pneg %p205
        %p384 = pneg %p202
        %s385 = sand.u32 %s192, 1
        %s386 = scalar_lea.sflag [#allocation3], %s385
        %s387 = sand.u32 %s192, 1
        %s388 = smul.addr %s387, 64
        %s389 = scalar_lea.vmem [#allocation2], %s388
        %p390 = pneg %p233
        %p391 = pneg %p230
        %s392 = sand.u32 %s30, 1
        %s393 = scalar_lea.sflag [#allocation5], %s392
        %s394 = sand.u32 %s220, 1
        %s395 = smul.addr %s394, 2
        %s396 = scalar_lea.vmem [#allocation4], %s395
        %p397 = pneg %p261
        %p398 = pneg %p258
        %s399 = sand.u32 %s30, 1
        %s400 = scalar_lea.sflag [#allocation5], %s399
        %s401 = sand.u32 %s248, 1
        %s402 = smul.addr %s401, 64
        %s403 = scalar_lea.vmem [#allocation6], %s402
        %p404 = pneg %p289
        %p405 = pneg %p286
        %s406 = sand.u32 %s276, 1
        %s407 = scalar_lea.sflag [#allocation8], %s406
        %s408 = sand.u32 %s276, 1
        %s409 = smul.addr %s408, 2
        %s410 = scalar_lea.vmem [#allocation7], %s409
        %s411 = smul.u32 8, %s35
        %p412 = scmp.lt.s32.totalorder %s34, 1
        %s413 = scalar_select %p412, %s34, 1
        %p414 = scmp.lt.s32.totalorder %s411, 7
        %s415 = scalar_select %p414, %s411, 7
        %s416 = smul.addr %s413, 8
        %s417 = sadd.s32 %s415, %s416
        %s418 = smul.addr %s417, 4
        %s419 = scalar_lea.vmem %s0, %s418
        %s420 = smul.u32 8, %s35
        %s421 = smul.u32 8, %s35
        %p422 = scmp.lt.s32.totalorder %s34, 1
        %s423 = scalar_select %p422, %s34, 1
        %p424 = scmp.lt.s32.totalorder %s421, 7
        %s425 = scalar_select %p424, %s421, 7
        %s426 = smul.addr %s423, 8
        %s427 = sadd.s32 %s425, %s426
        %s428 = smul.addr %s427, 4
        %s429 = scalar_lea.vmem %s3, %s428
        %s430 = smul.u32 8, %s35
        %s431 = smul.u32 8, %s35
        %s432 = smul.u32 8, %s35
        %v434 = vld [vmem:[%s419] sm:$0xf]
        %v435 = vld [vmem:[%s419 + $0x4] sm:$0xf]
        %v436 = vld [vmem:[%s419 + $0x8] sm:$0xf]
        %v437 = vld [vmem:[%s419 + $0xc] sm:$0xf]
        %v438 = vld [vmem:[%s419 + $0x10] sm:$0xf]
        %v439 = vld [vmem:[%s419 + $0x14] sm:$0xf]
        %v440 = vld [vmem:[%s419 + $0x18] sm:$0xf]
        %v441 = vld [vmem:[%s419 + $0x1c] sm:$0xf]
        %v442 = vld [vmem:[%s1] sm:$0xf]
        %v443 = vld [vmem:[%s1 + $0x4] sm:$0xf]
        %v444 = vld [vmem:[%s1 + $0x8] sm:$0xf]
        %v445 = vld [vmem:[%s1 + $0xc] sm:$0xf]
        %v446 = vld [vmem:[%s1 + $0x10] sm:$0x3]
        %v447 = vld [vmem:[%s2] sm:$0x1]
        %v449 = vlaneseq
        %v450 = vshrl.u32 %v449, 7
        %v451 = vsub.s32 0, %v450
        %v452 = vrot.slane %v447, %v451
        %v462 = vunpack.c.l.b16 %v434
        %v463 = vunpack.c.l.b16 %v435
        %v464 = vunpack.c.l.b16 %v436
        %v465 = vunpack.c.l.b16 %v437
        %v466 = vunpack.c.l.b16 %v438
        %v467 = vunpack.c.l.b16 %v439
        %v468 = vunpack.c.l.b16 %v440
        %v469 = vunpack.c.l.b16 %v441
        %v470 = vpack.c.b16 %v463, %v462
        %v471 = vpack.c.b16 %v465, %v464
        %v472 = vpack.c.b16 %v467, %v466
        %v473 = vpack.c.b16 %v469, %v468
        %v479 = vunpack.c.l.b16 %v442
        %v480 = vunpack.c.l.b16 %v443
        %v481 = vunpack.c.l.b16 %v444
        %v482 = vunpack.c.l.b16 %v445
        %v483 = vunpack.c.l.b16 %v446
        %v484 = vpack.c.b16 %v480, %v479
        %v485 = vpack.c.b16 %v482, %v481
        %v486 = vpack.c.b16 %v483, %v483
        %vm489 = vcmask 293888
        %v491 = vsel %vm489, %v470, 0
        %v494 = vsel %vm489, %v471, 0
        %v497 = vsel %vm489, %v472, 0
        %v500 = vsel %vm489, %v473, 0
        %vm502 = vcmask 1041408
        %v504 = vsel %vm502, %v486, 0
        %506 = vmatprep.subr.bf16.mxu0 0
        %507 = vmatpush1.bf16.msra.mxu0 %v484
        %508 = vmatprep.subr.bf16.mxu0 0
        %509 = vmatpush1.bf16.msra.mxu0 %v485
        %510 = vmatprep.subr.bf16.mxu0 0
        %511 = vmatpush1.bf16.msra.mxu0 %v504
        %512 = vmatprep.subr.bf16.mxu0 0
        %513 = vmatpush1.bf16.msra.mxu0 0
        %514 = vmatprep.subr.bf16.mxu0 0
        %515 = vmatpush1.bf16.msra.mxu0 0
        %516 = vmatprep.subr.bf16.mxu0 0
        %517 = vmatpush1.bf16.msra.mxu0 0
        %518 = vmatprep.subr.bf16.mxu0 0
        %519 = vmatpush1.bf16.msra.mxu0 0
        %520 = vmatprep.subr.bf16.mxu0 0
        %521 = vmatpush1.bf16.msra.mxu0 0
        %522 = vmatprep.subr.bf16.mxu0 0
        %523 = vmatpush1.bf16.msra.mxu0 0
        %524 = vmatprep.subr.bf16.mxu0 0
        %525 = vmatpush1.bf16.msra.mxu0 0
        %526 = vmatprep.subr.bf16.mxu0 0
        %527 = vmatpush1.bf16.msra.mxu0 0
        %528 = vmatprep.subr.bf16.mxu0 0
        %529 = vmatpush1.bf16.msra.mxu0 0
        %530 = vmatprep.subr.bf16.mxu0 0
        %531 = vmatpush1.bf16.msra.mxu0 0
        %532 = vmatprep.subr.bf16.mxu0 0
        %533 = vmatpush1.bf16.msra.mxu0 0
        %534 = vmatprep.subr.bf16.mxu0 0
        %535 = vmatpush1.bf16.msra.mxu0 0
        %536 = vmatprep.subr.bf16.mxu0 0
        %537 = vmatpush1.bf16.msra.mxu0 0
        %538 = vmatprep.mubr.bf16.mxu0 0
        %539 = vmatmul.mubr.bf16.gmra.mrb[0].mxu0 %v491
        %v540 = vpop.f32.mrb[0].mxu0
        %v541 = vadd.f32 %v452, %v540
        %v542 = vpop.f32.mrb[0].mxu0
        %v543 = vpop.f32.mrb[0].mxu0
        %v544 = vadd.f32 %v452, %v543
        %v545 = vpop.f32.mrb[0].mxu0
        %546 = vmatprep.mubr.bf16.mxu0 0
        %547 = vmatmul.mubr.bf16.gmra.mrb[0].mxu0 %v494
        %v548 = vpop.f32.mrb[0].mxu0
        %v549 = vadd.f32 %v452, %v548
        %v550 = vpop.f32.mrb[0].mxu0
        %v551 = vpop.f32.mrb[0].mxu0
        %v552 = vadd.f32 %v452, %v551
        %v553 = vpop.f32.mrb[0].mxu0
        %554 = vmatprep.mubr.bf16.mxu0 0
        %555 = vmatmul.mubr.bf16.gmra.mrb[0].mxu0 %v497
        %v556 = vpop.f32.mrb[0].mxu0
        %v557 = vadd.f32 %v452, %v556
        %v558 = vpop.f32.mrb[0].mxu0
        %v559 = vpop.f32.mrb[0].mxu0
        %v560 = vadd.f32 %v452, %v559
        %v561 = vpop.f32.mrb[0].mxu0
        %562 = vmatprep.mubr.bf16.mxu0 0
        %563 = vmatmul.mubr.bf16.gmra.mrb[0].mxu0 %v500
        %v564 = vpop.f32.mrb[0].mxu0
        %v565 = vadd.f32 %v452, %v564
        %v566 = vpop.f32.mrb[0].mxu0
        %v567 = vpop.f32.mrb[0].mxu0
        %v568 = vadd.f32 %v452, %v567
        %v569 = vpop.f32.mrb[0].mxu0
        %570 = vdwg.mxu0
        %571 = vst [vmem:[%s389] sm:$0xff] %v541
        %572 = vst [vmem:[%s389 + $0x8] sm:$0xff] %v544
        %573 = vst [vmem:[%s389 + $0x10] sm:$0xff] %v549
        %574 = vst [vmem:[%s389 + $0x18] sm:$0xff] %v552
        %575 = vst [vmem:[%s389 + $0x20] sm:$0xff] %v557
        %576 = vst [vmem:[%s389 + $0x28] sm:$0xff] %v560
        %577 = vst [vmem:[%s389 + $0x30] sm:$0xff] %v565
        %578 = vst [vmem:[%s389 + $0x38] sm:$0xff] %v568
        %v579 = vadd.f32 %v541, %v544
        %v580 = vadd.f32 %v579, %v549
        %v581 = vadd.f32 %v580, %v552
        %v582 = vadd.f32 %v581, %v557
        %v583 = vadd.f32 %v582, %v560
        %v584 = vadd.f32 %v583, %v565
        %v585 = vadd.f32 %v584, %v568
        %v586 = vrot.slane %v585, 4
        %v587 = vadd.f32 %v585, %v586
        %v588 = vrot.slane %v587, 2
        %v589 = vadd.f32 %v587, %v588
        %v590 = vrot.slane %v589, 1
        %v591 = vadd.f32 %v589, %v590
        %v592 = vmul.f32 %v591, 0.015625
        %v593 = vsub.f32 %v541, %v592
        %v594 = vsub.f32 %v544, %v592
        %v595 = vsub.f32 %v549, %v592
        %v596 = vsub.f32 %v552, %v592
        %v597 = vsub.f32 %v557, %v592
        %v598 = vsub.f32 %v560, %v592
        %v599 = vsub.f32 %v565, %v592
        %v600 = vsub.f32 %v568, %v592
        %v601 = vmul.f32 %v593, %v593
        %v602 = vmul.f32 %v594, %v594
        %v603 = vmul.f32 %v595, %v595
        %v604 = vmul.f32 %v596, %v596
        %v605 = vmul.f32 %v597, %v597
        %v606 = vmul.f32 %v598, %v598
        %v607 = vmul.f32 %v599, %v599
        %v608 = vmul.f32 %v600, %v600
        %v609 = vadd.f32 %v601, %v602
        %v610 = vadd.f32 %v609, %v603
        %v611 = vadd.f32 %v610, %v604
        %v612 = vadd.f32 %v611, %v605
        %v613 = vadd.f32 %v612, %v606
        %v614 = vadd.f32 %v613, %v607
        %v615 = vadd.f32 %v614, %v608
        %v616 = vrot.slane %v615, 4
        %v617 = vadd.f32 %v615, %v616
        %v618 = vrot.slane %v617, 2
        %v619 = vadd.f32 %v617, %v618
        %v620 = vrot.slane %v619, 1
        %v621 = vadd.f32 %v619, %v620
        %vm622 = vcmask 1040384
        %v623 = vsel %vm622, %v591, %v621
        %624 = vst [vmem:[%s396] sm:$0x3] %v623
        %v625 = vld [vmem:[%s429] sm:$0xf]
        %v626 = vld [vmem:[%s429 + $0x4] sm:$0xf]
        %v627 = vld [vmem:[%s429 + $0x8] sm:$0xf]
        %v628 = vld [vmem:[%s429 + $0xc] sm:$0xf]
        %v629 = vld [vmem:[%s429 + $0x10] sm:$0xf]
        %v630 = vld [vmem:[%s429 + $0x14] sm:$0xf]
        %v631 = vld [vmem:[%s429 + $0x18] sm:$0xf]
        %v632 = vld [vmem:[%s429 + $0x1c] sm:$0xf]
        %v633 = vld [vmem:[%s4] sm:$0x3]
        %v634 = vld [vmem:[%s5] sm:$0x1]
        %v636 = vlaneseq
        %v637 = vshrl.u32 %v636, 7
        %v638 = vsub.s32 0, %v637
        %v639 = vrot.slane %v634, %v638
        %v649 = vunpack.c.l.b16 %v625
        %v650 = vunpack.c.l.b16 %v626
        %v651 = vunpack.c.l.b16 %v627
        %v652 = vunpack.c.l.b16 %v628
        %v653 = vunpack.c.l.b16 %v629
        %v654 = vunpack.c.l.b16 %v630
        %v655 = vunpack.c.l.b16 %v631
        %v656 = vunpack.c.l.b16 %v632
        %v657 = vpack.c.b16 %v650, %v649
        %v658 = vpack.c.b16 %v652, %v651
        %v659 = vpack.c.b16 %v654, %v653
        %v660 = vpack.c.b16 %v656, %v655
        %vm661 = vcmask 31744
        %v663 = vsel %vm661, %v657, 0
        %v666 = vsel %vm661, %v658, 0
        %v669 = vsel %vm661, %v659, 0
        %v672 = vsel %vm661, %v660, 0
        %v675 = vsel %vm502, %v633, 0
        %677 = vmatprep.subr.bf16.mxu0 0
        %678 = vmatpush1.bf16.msra.mxu0 %v675
        %679 = vmatprep.subr.bf16.mxu0 0
        %680 = vmatpush1.bf16.msra.mxu0 0
        %681 = vmatprep.subr.bf16.mxu0 0
        %682 = vmatpush1.bf16.msra.mxu0 0
        %683 = vmatprep.subr.bf16.mxu0 0
        %684 = vmatpush1.bf16.msra.mxu0 0
        %685 = vmatprep.subr.bf16.mxu0 0
        %686 = vmatpush1.bf16.msra.mxu0 0
        %687 = vmatprep.subr.bf16.mxu0 0
        %688 = vmatpush1.bf16.msra.mxu0 0
        %689 = vmatprep.subr.bf16.mxu0 0
        %690 = vmatpush1.bf16.msra.mxu0 0
        %691 = vmatprep.subr.bf16.mxu0 0
        %692 = vmatpush1.bf16.msra.mxu0 0
        %693 = vmatprep.subr.bf16.mxu0 0
        %694 = vmatpush1.bf16.msra.mxu0 0
        %695 = vmatprep.subr.bf16.mxu0 0
        %696 = vmatpush1.bf16.msra.mxu0 0
        %697 = vmatprep.subr.bf16.mxu0 0
        %698 = vmatpush1.bf16.msra.mxu0 0
        %699 = vmatprep.subr.bf16.mxu0 0
        %700 = vmatpush1.bf16.msra.mxu0 0
        %701 = vmatprep.subr.bf16.mxu0 0
        %702 = vmatpush1.bf16.msra.mxu0 0
        %703 = vmatprep.subr.bf16.mxu0 0
        %704 = vmatpush1.bf16.msra.mxu0 0
        %705 = vmatprep.subr.bf16.mxu0 0
        %706 = vmatpush1.bf16.msra.mxu0 0
        %707 = vmatprep.subr.bf16.mxu0 0
        %708 = vmatpush1.bf16.msra.mxu0 0
        %709 = vmatprep.mubr.bf16.mxu0 0
        %710 = vmatmul.mubr.bf16.gmra.mrb[0].mxu0 %v663
        %v711 = vpop.f32.mrb[0].mxu0
        %v712 = vadd.f32 %v639, %v711
        %v713 = vpop.f32.mrb[0].mxu0
        %v714 = vpop.f32.mrb[0].mxu0
        %v715 = vadd.f32 %v639, %v714
        %v716 = vpop.f32.mrb[0].mxu0
        %717 = vmatprep.mubr.bf16.mxu0 0
        %718 = vmatmul.mubr.bf16.gmra.mrb[0].mxu0 %v666
        %v719 = vpop.f32.mrb[0].mxu0
        %v720 = vadd.f32 %v639, %v719
        %v721 = vpop.f32.mrb[0].mxu0
        %v722 = vpop.f32.mrb[0].mxu0
        %v723 = vadd.f32 %v639, %v722
        %v724 = vpop.f32.mrb[0].mxu0
        %725 = vmatprep.mubr.bf16.mxu0 0
        %726 = vmatmul.mubr.bf16.gmra.mrb[0].mxu0 %v669
        %v727 = vpop.f32.mrb[0].mxu0
        %v728 = vadd.f32 %v639, %v727
        %v729 = vpop.f32.mrb[0].mxu0
        %v730 = vpop.f32.mrb[0].mxu0
        %v731 = vadd.f32 %v639, %v730
        %v732 = vpop.f32.mrb[0].mxu0
        %733 = vmatprep.mubr.bf16.mxu0 0
        %734 = vmatmul.mubr.bf16.gmra.mrb[0].mxu0 %v672
        %v735 = vpop.f32.mrb[0].mxu0
        %v736 = vadd.f32 %v639, %v735
        %v737 = vpop.f32.mrb[0].mxu0
        %v738 = vpop.f32.mrb[0].mxu0
        %v739 = vadd.f32 %v639, %v738
        %v740 = vpop.f32.mrb[0].mxu0
        %741 = vdwg.mxu0
        %742 = vst [vmem:[%s403] sm:$0xff] %v712
        %743 = vst [vmem:[%s403 + $0x8] sm:$0xff] %v715
        %744 = vst [vmem:[%s403 + $0x10] sm:$0xff] %v720
        %745 = vst [vmem:[%s403 + $0x18] sm:$0xff] %v723
        %746 = vst [vmem:[%s403 + $0x20] sm:$0xff] %v728
        %747 = vst [vmem:[%s403 + $0x28] sm:$0xff] %v731
        %748 = vst [vmem:[%s403 + $0x30] sm:$0xff] %v736
        %749 = vst [vmem:[%s403 + $0x38] sm:$0xff] %v739
        %v750 = vadd.f32 %v712, %v715
        %v751 = vadd.f32 %v750, %v720
        %v752 = vadd.f32 %v751, %v723
        %v753 = vadd.f32 %v752, %v728
        %v754 = vadd.f32 %v753, %v731
        %v755 = vadd.f32 %v754, %v736
        %v756 = vadd.f32 %v755, %v739
        %v757 = vrot.slane %v756, 4
        %v758 = vadd.f32 %v756, %v757
        %v759 = vrot.slane %v758, 2
        %v760 = vadd.f32 %v758, %v759
        %v761 = vrot.slane %v760, 1
        %v762 = vadd.f32 %v760, %v761
        %v763 = vmul.f32 %v762, 0.015625
        %v764 = vsub.f32 %v712, %v763
        %v765 = vsub.f32 %v715, %v763
        %v766 = vsub.f32 %v720, %v763
        %v767 = vsub.f32 %v723, %v763
        %v768 = vsub.f32 %v728, %v763
        %v769 = vsub.f32 %v731, %v763
        %v770 = vsub.f32 %v736, %v763
        %v771 = vsub.f32 %v739, %v763
        %v772 = vmul.f32 %v764, %v764
        %v773 = vmul.f32 %v765, %v765
        %v774 = vmul.f32 %v766, %v766
        %v775 = vmul.f32 %v767, %v767
        %v776 = vmul.f32 %v768, %v768
        %v777 = vmul.f32 %v769, %v769
        %v778 = vmul.f32 %v770, %v770
        %v779 = vmul.f32 %v771, %v771
        %v780 = vadd.f32 %v772, %v773
        %v781 = vadd.f32 %v780, %v774
        %v782 = vadd.f32 %v781, %v775
        %v783 = vadd.f32 %v782, %v776
        %v784 = vadd.f32 %v783, %v777
        %v785 = vadd.f32 %v784, %v778
        %v786 = vadd.f32 %v785, %v779
        %v787 = vrot.slane %v786, 4
        %v788 = vadd.f32 %v786, %v787
        %v789 = vrot.slane %v788, 2
        %v790 = vadd.f32 %v788, %v789
        %v791 = vrot.slane %v790, 1
        %v792 = vadd.f32 %v790, %v791
        %v793 = vsel %vm622, %v762, %v792
        %794 = vst [vmem:[%s410] sm:$0x3] %v793
        %s795 = sand.u32 %s192, 1
        %s796 = scalar_lea.sflag [#allocation3], %s795
        %s797 = sand.u32 %s192, 1
        %s798 = smul.addr %s797, 64
        %s799 = scalar_lea.vmem [#allocation2], %s798
        %s800 = sand.u32 %s30, 1
        %s801 = scalar_lea.sflag [#allocation5], %s800
        %s802 = sand.u32 %s220, 1
        %s803 = smul.addr %s802, 2
        %s804 = scalar_lea.vmem [#allocation4], %s803
        %s805 = sand.u32 %s30, 1
        %s806 = scalar_lea.sflag [#allocation5], %s805
        %s807 = sand.u32 %s248, 1
        %s808 = smul.addr %s807, 64
        %s809 = scalar_lea.vmem [#allocation6], %s808
        %s810 = sand.u32 %s276, 1
        %s811 = scalar_lea.sflag [#allocation8], %s810
        %s812 = sand.u32 %s276, 1
        %s813 = smul.addr %s812, 2
        %s814 = scalar_lea.vmem [#allocation7], %s813
        // Predicated region
        $region45: #{tpu_custom_call.1} parent=43 // pred_check
          %p815 = pneg %p202
        $region46: #{tpu_custom_call.1} parent=43 // pred_check_branch
          %817 = sbr.rel (%p815) target = $region48
        $region47: #{tpu_custom_call.1} parent=43 // pred_region
          %s818 = smul.u32 8, %s35
          %s820 = ssub.s32 1024, 1024
          %821 = vsyncadd %s796, %s820
          %s822 = smul.addr %s34, 8
          %s823 = sadd.s32 %s818, %s822
          %s824 = smul.addr %s823, 128
          %s825 = scalar_lea.hbm %s6, %s824
          %s826 = sshll.u32 %s799, 4
          %s827 = int_to_ptr.vmem [resolvable:$true] %s826
          %832 = dma.vmem_to_hbm [thread:$0]  %s827, 1024, %s825, %s796, 128, 128, 8
        $region48: #{tpu_custom_call.1} parent=43 // pred_fallthru
          _
        // Predicated region
        $region49: #{tpu_custom_call.1} parent=43 // pred_check
          %p833 = pneg %p230
        $region50: #{tpu_custom_call.1} parent=43 // pred_check_branch
          %835 = sbr.rel (%p833) target = $region52
        $region51: #{tpu_custom_call.1} parent=43 // pred_region
          %s837 = ssub.s32 32, 32
          %838 = vsyncadd %s801, %s837
          %s839 = sadd.s32 %s35, %s34
          %s840 = smul.addr %s839, 32
          %s841 = scalar_lea.hbm %s7, %s840
          %s843 = sshll.u32 %s804, 4
          %s844 = int_to_ptr.vmem [resolvable:$true] %s843
          %846 = dma.vmem_to_hbm [thread:$0]  %s844, 32, %s841, %s801
        $region52: #{tpu_custom_call.1} parent=43 // pred_fallthru
          _
        // Predicated region
        $region53: #{tpu_custom_call.1} parent=43 // pred_check
          %p847 = pneg %p258
        $region54: #{tpu_custom_call.1} parent=43 // pred_check_branch
          %849 = sbr.rel (%p847) target = $region56
        $region55: #{tpu_custom_call.1} parent=43 // pred_region
          %s850 = smul.u32 8, %s35
          %s852 = ssub.s32 1024, 1024
          %853 = vsyncadd %s806, %s852
          %s854 = smul.addr %s34, 8
          %s855 = sadd.s32 %s850, %s854
          %s856 = smul.addr %s855, 128
          %s857 = scalar_lea.hbm %s8, %s856
          %s858 = sshll.u32 %s809, 4
          %s859 = int_to_ptr.vmem [resolvable:$true] %s858
          %864 = dma.vmem_to_hbm [thread:$0]  %s859, 1024, %s857, %s806, 128, 128, 8
        $region56: #{tpu_custom_call.1} parent=43 // pred_fallthru
          _
        // Predicated region
        $region57: #{tpu_custom_call.1} parent=43 // pred_check
          %p865 = pneg %p286
        $region58: #{tpu_custom_call.1} parent=43 // pred_check_branch
          %867 = sbr.rel (%p865) target = $region60
        $region59: #{tpu_custom_call.1} parent=43 // pred_region
          %s869 = ssub.s32 32, 32
          %870 = vsyncadd %s811, %s869
          %s871 = sadd.s32 %s35, %s34
          %s872 = smul.addr %s871, 32
          %s873 = scalar_lea.hbm %s9, %s872
          %s875 = sshll.u32 %s814, 4
          %s876 = int_to_ptr.vmem [resolvable:$true] %s875
          %878 = dma.vmem_to_hbm [thread:$0]  %s876, 32, %s873, %s811
        $region60: #{tpu_custom_call.1} parent=43 // pred_fallthru
          _
      $region44: #{tpu_custom_call.1} parent=5 // pred_fallthru
        _
      %p879 = scmp.le.s32.totalorder 2, %s25
      // Predicated region
      $region61: #{tpu_custom_call.1} parent=5 // pred_check
        %p880 = pneg %p879
      $region62: #{tpu_custom_call.1} parent=5 // pred_check_branch
        %882 = sbr.rel (%p880) target = $region64
      $region63: #{tpu_custom_call.1} parent=5 // pred_region
        %s883 = ssub.s32 %s25, 2
        // Predicated region
        $region65: #{tpu_custom_call.1} parent=63 // pred_check
          %p884 = pneg %p208
        $region66: #{tpu_custom_call.1} parent=63 // pred_check_branch
          %886 = sbr.rel (%p884) target = $region68
        $region67: #{tpu_custom_call.1} parent=63 // pred_region
          %s887 = sand.u32 %s193, 1
          %s888 = scalar_lea.sflag [#allocation3], %s887
          %s889 = sand.u32 %s193, 1
          %s890 = smul.addr %s889, 64
          %s891 = scalar_lea.vmem [#allocation2], %s890
          %892 = dma.done %s888, 1024
        $region68: #{tpu_custom_call.1} parent=63 // pred_fallthru
          _
        // Predicated region
        $region69: #{tpu_custom_call.1} parent=63 // pred_check
          %p893 = pneg %p236
        $region70: #{tpu_custom_call.1} parent=63 // pred_check_branch
          %895 = sbr.rel (%p893) target = $region72
        $region71: #{tpu_custom_call.1} parent=63 // pred_region
          %s896 = sand.u32 %s31, 1
          %s897 = scalar_lea.sflag [#allocation5], %s896
          %s898 = sand.u32 %s221, 1
          %s899 = smul.addr %s898, 2
          %s900 = scalar_lea.vmem [#allocation4], %s899
          %901 = dma.done %s897, 32
        $region72: #{tpu_custom_call.1} parent=63 // pred_fallthru
          _
        // Predicated region
        $region73: #{tpu_custom_call.1} parent=63 // pred_check
          %p902 = pneg %p264
        $region74: #{tpu_custom_call.1} parent=63 // pred_check_branch
          %904 = sbr.rel (%p902) target = $region76
        $region75: #{tpu_custom_call.1} parent=63 // pred_region
          %s905 = sand.u32 %s31, 1
          %s906 = scalar_lea.sflag [#allocation5], %s905
          %s907 = sand.u32 %s249, 1
          %s908 = smul.addr %s907, 64
          %s909 = scalar_lea.vmem [#allocation6], %s908
          %910 = dma.done %s906, 1024
        $region76: #{tpu_custom_call.1} parent=63 // pred_fallthru
          _
        // Predicated region
        $region77: #{tpu_custom_call.1} parent=63 // pred_check
          %p911 = pneg %p292
        $region78: #{tpu_custom_call.1} parent=63 // pred_check_branch
          %913 = sbr.rel (%p911) target = $region80
        $region79: #{tpu_custom_call.1} parent=63 // pred_region
          %s914 = sand.u32 %s277, 1
          %s915 = scalar_lea.sflag [#allocation8], %s914
          %s916 = sand.u32 %s277, 1
          %s917 = smul.addr %s916, 2
          %s918 = scalar_lea.vmem [#allocation7], %s917
          %919 = dma.done %s915, 32
        $region80: #{tpu_custom_call.1} parent=63 // pred_fallthru
          _
      $region64: #{tpu_custom_call.1} parent=5 // pred_fallthru
        _
    $region6: #{tpu_custom_call.1} parent=1 // loop_footer
      %s29 = sadd.s32 1, %s25
    $region7: #{tpu_custom_call.1} parent=1 // loop_footer_branch
      %24 = sbr.rel target = $region3
    $region8: #{tpu_custom_call.1} parent=1 // loop_exit
      _
    %920 = vsyncpa [#allocation3], 1
    %s921 = scalar_lea.sflag [#allocation3], 1
    %922 = vsyncpa %s921, 1
    %923 = vsyncpa [#allocation5], 1
    %s924 = scalar_lea.sflag [#allocation5], 1
    %925 = vsyncpa %s924, 1
    %926 = vsyncpa [#allocation8], 1
    %s927 = scalar_lea.sflag [#allocation8], 1
    %928 = vsyncpa %s927, 1

</llo_original>
